<compile_context>
chip_gen: v6e
topology: v6e:2x2x1
jax: 0.10.0
libtpu: 0.0.40
codegen_flags: <defaults>
</compile_context>

<pallas_src>
import math
import numpy as np
import jax
import jax.numpy as jnp
from jax import lax
from jax.experimental import pallas as pl
from jax.experimental.pallas import tpu as pltpu


def glora_linear_kernel(x_ref, w_ref, ad_ref, au_ref, bd_ref, bu_ref,
                        c_ref, bias_ref, out_ref,
                        acc_ref, xbu_ref, wc_ref):
    k = pl.program_id(2)

    @pl.when(k == 0)
    def _():
        acc_ref[...] = jnp.zeros_like(acc_ref)
        xbu_ref[...] = jnp.zeros_like(xbu_ref)
        wc_ref[...] = jnp.zeros_like(wc_ref)

    x = x_ref[...]            # (tm, tk)
    w = w_ref[...]            # (tn, tk)

    # (1 + A) tile: the "+1" rank-1 term is folded into the padded rank slot
    # of Ad/Au in the wrapper, so a single small matmul produces (1 + A) and
    # no extra (tn, tk) VPU add is needed.
    a1_tile = jnp.dot(ad_ref[...], au_ref[...],
                      preferred_element_type=jnp.float32)          # (tn, tk)
    w_eff = w * a1_tile

    contract_k = (((1,), (1,)), ((), ()))     # contract last dim of both operands

    # Main matmul: x (tm, tk) x W_eff (tn, tk) -> (tm, tn), no transpose.
    acc_ref[...] += lax.dot_general(x, w_eff, contract_k,
                                    preferred_element_type=jnp.float32)
    # Low-rank B path: accumulate x @ Bu.T over K  -> (tm, rp).
    xbu_ref[...] += lax.dot_general(x, bu_ref[...], contract_k,
                                    preferred_element_type=jnp.float32)
    # Bias C path: accumulate C_row (1, tk) x W (tn, tk) -> (1, tn) == (W @ C).T tile.
    wc_ref[...] += lax.dot_general(c_ref[...], w, contract_k,
                                   preferred_element_type=jnp.float32)

    @pl.when(k == pl.num_programs(2) - 1)
    def _():
        # Finish the B path: (tm, rp) x Bd (tn, rp) -> (tm, tn).
        y = acc_ref[...] + lax.dot_general(xbu_ref[...], bd_ref[...], contract_k,
                                           preferred_element_type=jnp.float32)
        out_ref[...] = (y + bias_ref[...] + wc_ref[...]).astype(out_ref.dtype)


def _round_up(a, b):
    return -(-a // b) * b


def glora_linear(x, w, bias, Ad, Au, Bd, Bu, Cd, Cu, D, E,
                 *, tm_cap=256, tn_cap=512, tk_cap=2048):
    M, K = x.shape
    N = w.shape[0]
    r = Ad.shape[1]
    f32 = jnp.float32

    # Rank padded to a sublane multiple, with one extra slot reserved for the
    # folded "+1" of W*(1+A).
    rp = _round_up(r + 1, 8)

    # Tile sizes (large tiles so each grid step streams a multi-MB W block and
    # per-step overhead stays <10-20% of the DMA time).
    tm = min(tm_cap, _round_up(M, 8))
    tn = min(tn_cap, _round_up(N, 128))
    tk = min(tk_cap, _round_up(K, 128))

    # Keep >= 2 blocks on a "parallel" axis so v7x's two TensorCores can both
    # work (no-op on single-TC v5e/v6e).
    if (_round_up(M, tm) // tm) < 2 and (_round_up(N, tn) // tn) < 2 and tn >= 256:
        tn //= 2   # stays a multiple of 128

    Mp, Np, Kp = _round_up(M, tm), _round_up(N, tn), _round_up(K, tk)

    # Zero-pad ragged shapes (exact: padded rows/cols contribute nothing and
    # the padded output region is sliced off).
    x_p = jnp.pad(x, ((0, Mp - M), (0, Kp - K)))
    w_p = jnp.pad(w.astype(f32), ((0, Np - N), (0, Kp - K)))

    # A path with the "+1" folded into the padded rank slot:
    #   Ad_p[:, r] = 1,  Au_p[r, :] = 1   =>   Ad_p @ Au_p = Ad@Au + 1
    Ad_p = (jnp.zeros((Np, rp), f32)
            .at[:N, :r].set(Ad.astype(f32))
            .at[:N, r].set(1.0))
    Au_p = (jnp.zeros((rp, Kp), f32)
            .at[:r, :K].set(Au.astype(f32))
            .at[r, :K].set(1.0))

    # B path: plain zero-padding.
    Bd_p = jnp.zeros((Np, rp), f32).at[:N, :r].set(Bd.astype(f32))
    Bu_p = jnp.zeros((rp, Kp), f32).at[:r, :K].set(Bu.astype(f32))

    # Hoisted tiny precompute (off the hot K loop):
    #   C as a (1, K) row vector and the static part of the effective bias.
    c_row = jnp.dot(Cd.astype(f32), Cu.astype(f32),
                    preferred_element_type=f32).reshape(1, K)
    c_row = jnp.pad(c_row, ((0, 0), (0, Kp - K)))
    bias_eff = (bias * (1.0 + D) + E).reshape(1, N).astype(f32)
    bias_eff = jnp.pad(bias_eff, ((0, 0), (0, Np - N)))

    grid = (Mp // tm, Np // tn, Kp // tk)

    in_specs = [
        pl.BlockSpec((tm, tk), lambda i, j, k: (i, k)),   # x
        pl.BlockSpec((tn, tk), lambda i, j, k: (j, k)),   # W
        pl.BlockSpec((tn, rp), lambda i, j, k: (j, 0)),   # Ad (padded, +1 folded)
        pl.BlockSpec((rp, tk), lambda i, j, k: (0, k)),   # Au (padded, +1 folded)
        pl.BlockSpec((tn, rp), lambda i, j, k: (j, 0)),   # Bd (padded)
        pl.BlockSpec((rp, tk), lambda i, j, k: (0, k)),   # Bu (padded)
        pl.BlockSpec((1, tk), lambda i, j, k: (0, k)),    # C row
        pl.BlockSpec((1, tn), lambda i, j, k: (0, j)),    # bias*(1+D)+E
    ]
    out_spec = pl.BlockSpec((tm, tn), lambda i, j, k: (i, j))

    out_p = pl.pallas_call(
        glora_linear_kernel,
        out_shape=jax.ShapeDtypeStruct((Mp, Np), x.dtype),
        grid=grid,
        in_specs=in_specs,
        out_specs=out_spec,
        scratch_shapes=[
            pltpu.VMEM((tm, tn), jnp.float32),   # main accumulator
            pltpu.VMEM((tm, rp), jnp.float32),   # x @ Bu.T accumulator
            pltpu.VMEM((1, tn), jnp.float32),    # (W @ C).T accumulator
        ],
        compiler_params=pltpu.CompilerParams(
            dimension_semantics=("parallel", "parallel", "arbitrary"),
            # Large enough for the ~14 MB double-buffered footprint on all
            # generations; kept below v7x's 64 MiB/TC physical VMEM.
            vmem_limit_bytes=48 * 1024 * 1024),
    )(x_p, w_p, Ad_p, Au_p, Bd_p, Bu_p, c_row, bias_eff)

    return out_p[:M, :N]


def ref_forward(x, w, bias, Ad, Au, Bd, Bu, Cd, Cu, D, E):
    A = Ad @ Au
    B = Bd @ Bu
    C = Cd @ Cu
    w_eff = w + w * A + B
    b_eff = bias + bias * D + E + (w @ C)[:, 0]
    return x @ w_eff.T + b_eff


if __name__ == "__main__":
    # Small, deterministic setup. Ragged M/N/K exercise the padding path;
    # tk_cap is reduced only so the K-reduction loop has >1 step at this size
    # (production defaults are tm_cap=256, tn_cap=512, tk_cap=2048).
    batch, in_features, out_features, r = 10, 320, 200, 4
    key = jax.random.PRNGKey(0)
    ks = jax.random.split(key, 10)

    dt = jnp.float32
    x = jax.random.normal(ks[0], (batch, in_features), dtype=dt)

    # Base nn.Linear weight/bias (frozen in GLoRA).
    w = jax.random.normal(ks[1], (out_features, in_features), dtype=dt) / math.sqrt(in_features)
    bias = jax.random.normal(ks[2], (out_features,), dtype=dt) * 0.1

    # GLoRA parameters (deterministic non-zero values so every term is exercised).
    kaiming = lambda k, shape: jax.random.uniform(
        k, shape, dtype=dt, minval=-1.0, maxval=1.0) / math.sqrt(shape[1])
    Ad = 0.05 * jax.random.normal(ks[3], (out_features, r), dtype=dt)
    Au = kaiming(ks[4], (r, in_features))
    Bd = 0.05 * jax.random.normal(ks[5], (out_features, r), dtype=dt)
    Bu = kaiming(ks[6], (r, in_features))
    Cd = 0.05 * jax.random.normal(ks[7], (in_features, r), dtype=dt)
    Cu = kaiming(ks[8], (r, 1))
    D = 0.05 * jax.random.normal(ks[9], (out_features,), dtype=dt)
    E = 0.05 * jax.random.normal(jax.random.fold_in(key, 99), (out_features,), dtype=dt)

    out = glora_linear(x, w, bias, Ad, Au, Bd, Bu, Cd, Cu, D, E, tk_cap=128)
    out = jax.block_until_ready(out)

    ref = ref_forward(x, w, bias, Ad, Au, Bd, Bu, Cd, Cu, D, E)
    np.testing.assert_allclose(np.asarray(out), np.asarray(ref), rtol=2e-3, atol=2e-3)

    print("KERNEL_OK")
</pallas_src>

<mosaic_0001>
module attributes {stable_mosaic.version = 11 : i64} {
  func.func @glora_linear_kernel(%arg0: i32, %arg1: i32, %arg2: i32, %arg3: memref<16x128xf32, #tpu.memory_space<vmem>>, %arg4: memref<128x128xf32, #tpu.memory_space<vmem>>, %arg5: memref<128x8xf32, #tpu.memory_space<vmem>>, %arg6: memref<8x128xf32, #tpu.memory_space<vmem>>, %arg7: memref<128x8xf32, #tpu.memory_space<vmem>>, %arg8: memref<8x128xf32, #tpu.memory_space<vmem>>, %arg9: memref<1x128xf32, #tpu.memory_space<vmem>>, %arg10: memref<1x128xf32, #tpu.memory_space<vmem>>, %arg11: memref<16x128xf32, #tpu.memory_space<vmem>>, %arg12: memref<16x128xf32, #tpu.memory_space<vmem>>, %arg13: memref<16x8xf32, #tpu.memory_space<vmem>>, %arg14: memref<1x128xf32, #tpu.memory_space<vmem>>) attributes {dimension_semantics = [#tpu.dimension_semantics<parallel>, #tpu.dimension_semantics<parallel>, #tpu.dimension_semantics<arbitrary>], iteration_bounds = array<i64: 1, 2, 3>, scalar_prefetch = 0 : i64, scratch_operands = 3 : i64, tpu.core_type = #tpu.core_type<tc>, window_params = [{transform_indices = @transform_0, window_bounds = array<i64: 16, 128>}, {transform_indices = @transform_1, window_bounds = array<i64: 128, 128>}, {transform_indices = @transform_2, window_bounds = array<i64: 128, 8>}, {transform_indices = @transform_3, window_bounds = array<i64: 8, 128>}, {transform_indices = @transform_4, window_bounds = array<i64: 128, 8>}, {transform_indices = @transform_5, window_bounds = array<i64: 8, 128>}, {transform_indices = @transform_6, window_bounds = array<i64: 1, 128>}, {transform_indices = @transform_7, window_bounds = array<i64: 1, 128>}, {transform_indices = @transform_8, window_bounds = array<i64: 16, 128>}]} {
    %c0_i32 = arith.constant 0 : i32
    %0 = arith.cmpi eq, %arg2, %c0_i32 : i32
    %1 = arith.extui %0 : i1 to i32
    %c0_i32_0 = arith.constant 0 : i32
    %2 = arith.cmpi ne, %1, %c0_i32_0 : i32
    scf.if %2 {
      %cst_28 = arith.constant 0.000000e+00 : f32
      %26 = vector.broadcast %cst_28 : f32 to vector<16x128xf32>
      %c0_29 = arith.constant 0 : index
      %c0_30 = arith.constant 0 : index
      %27 = vector.load %arg12[%c0_29, %c0_30] : memref<16x128xf32, #tpu.memory_space<vmem>>, vector<16x128xf32>
      tpu.vector_store %arg12[%c0_29, %c0_30], %26 {strides = array<i32>} : memref<16x128xf32, #tpu.memory_space<vmem>>, vector<16x128xf32>,
      %cst_31 = arith.constant 0.000000e+00 : f32
      %28 = vector.broadcast %cst_31 : f32 to vector<16x8xf32>
      %c0_32 = arith.constant 0 : index
      %c0_33 = arith.constant 0 : index
      %29 = vector.load %arg13[%c0_32, %c0_33] : memref<16x8xf32, #tpu.memory_space<vmem>>, vector<16x8xf32>
      tpu.vector_store %arg13[%c0_32, %c0_33], %28 {strides = array<i32>} : memref<16x8xf32, #tpu.memory_space<vmem>>, vector<16x8xf32>,
      %cst_34 = arith.constant 0.000000e+00 : f32
      %30 = vector.broadcast %cst_34 : f32 to vector<1x128xf32>
      %c0_35 = arith.constant 0 : index
      %c0_36 = arith.constant 0 : index
      %31 = vector.load %arg14[%c0_35, %c0_36] : memref<1x128xf32, #tpu.memory_space<vmem>>, vector<1x128xf32>
      tpu.vector_store %arg14[%c0_35, %c0_36], %30 {strides = array<i32>} : memref<1x128xf32, #tpu.memory_space<vmem>>, vector<1x128xf32>,
    } else {
    }
    %c0 = arith.constant 0 : index
    %c0_1 = arith.constant 0 : index
    %3 = vector.load %arg3[%c0, %c0_1] : memref<16x128xf32, #tpu.memory_space<vmem>>, vector<16x128xf32>
    %c0_2 = arith.constant 0 : index
    %c0_3 = arith.constant 0 : index
    %4 = vector.load %arg4[%c0_2, %c0_3] : memref<128x128xf32, #tpu.memory_space<vmem>>, vector<128x128xf32>
    %c0_4 = arith.constant 0 : index
    %c0_5 = arith.constant 0 : index
    %5 = vector.load %arg5[%c0_4, %c0_5] : memref<128x8xf32, #tpu.memory_space<vmem>>, vector<128x8xf32>
    %c0_6 = arith.constant 0 : index
    %c0_7 = arith.constant 0 : index
    %6 = vector.load %arg6[%c0_6, %c0_7] : memref<8x128xf32, #tpu.memory_space<vmem>>, vector<8x128xf32>
    %cst = arith.constant dense<0.000000e+00> : vector<128x128xf32>
    %7 = tpu.matmul %5, %6, %cst {dimension_numbers = #tpu.dot_dimension_numbers<[1], [0], [0], [1], [0, 0, 1, 1], [], []>} : vector<128x8xf32>, vector<8x128xf32>, vector<128x128xf32> -> vector<128x128xf32>
    %8 = arith.mulf %4, %7 : vector<128x128xf32>
    %c0_8 = arith.constant 0 : index
    %c0_9 = arith.constant 0 : index
    %9 = vector.load %arg12[%c0_8, %c0_9] : memref<16x128xf32, #tpu.memory_space<vmem>>, vector<16x128xf32>
    %cst_10 = arith.constant dense<0.000000e+00> : vector<16x128xf32>
    %10 = tpu.matmul %3, %8, %cst_10 {dimension_numbers = #tpu.dot_dimension_numbers<[1], [1], [0], [0], [0, 0, 1, 0], [], []>} : vector<16x128xf32>, vector<128x128xf32>, vector<16x128xf32> -> vector<16x128xf32>
    %11 = arith.addf %9, %10 : vector<16x128xf32>
    %c0_11 = arith.constant 0 : index
    %c0_12 = arith.constant 0 : index
    %12 = vector.load %arg12[%c0_11, %c0_12] : memref<16x128xf32, #tpu.memory_space<vmem>>, vector<16x128xf32>
    tpu.vector_store %arg12[%c0_11, %c0_12], %11 {strides = array<i32>} : memref<16x128xf32, #tpu.memory_space<vmem>>, vector<16x128xf32>,
    %c0_13 = arith.constant 0 : index
    %c0_14 = arith.constant 0 : index
    %13 = vector.load %arg13[%c0_13, %c0_14] : memref<16x8xf32, #tpu.memory_space<vmem>>, vector<16x8xf32>
    %c0_15 = arith.constant 0 : index
    %c0_16 = arith.constant 0 : index
    %14 = vector.load %arg8[%c0_15, %c0_16] : memref<8x128xf32, #tpu.memory_space<vmem>>, vector<8x128xf32>
    %cst_17 = arith.constant dense<0.000000e+00> : vector<16x8xf32>
    %15 = tpu.matmul %3, %14, %cst_17 {dimension_numbers = #tpu.dot_dimension_numbers<[1], [1], [0], [0], [0, 0, 1, 0], [], []>} : vector<16x128xf32>, vector<8x128xf32>, vector<16x8xf32> -> vector<16x8xf32>
    %16 = arith.addf %13, %15 : vector<16x8xf32>
    %c0_18 = arith.constant 0 : index
    %c0_19 = arith.constant 0 : index
    %17 = vector.load %arg13[%c0_18, %c0_19] : memref<16x8xf32, #tpu.memory_space<vmem>>, vector<16x8xf32>
    tpu.vector_store %arg13[%c0_18, %c0_19], %16 {strides = array<i32>} : memref<16x8xf32, #tpu.memory_space<vmem>>, vector<16x8xf32>,
    %c0_20 = arith.constant 0 : index
    %c0_21 = arith.constant 0 : index
    %18 = vector.load %arg14[%c0_20, %c0_21] : memref<1x128xf32, #tpu.memory_space<vmem>>, vector<1x128xf32>
    %c0_22 = arith.constant 0 : index
    %c0_23 = arith.constant 0 : index
    %19 = vector.load %arg9[%c0_22, %c0_23] : memref<1x128xf32, #tpu.memory_space<vmem>>, vector<1x128xf32>
    %cst_24 = arith.constant dense<0.000000e+00> : vector<1x128xf32>
    %20 = tpu.matmul %19, %4, %cst_24 {dimension_numbers = #tpu.dot_dimension_numbers<[1], [1], [0], [0], [0, 0, 1, 0], [], []>} : vector<1x128xf32>, vector<128x128xf32>, vector<1x128xf32> -> vector<1x128xf32>
    %21 = arith.addf %18, %20 : vector<1x128xf32>
    %c0_25 = arith.constant 0 : index
    %c0_26 = arith.constant 0 : index
    %22 = vector.load %arg14[%c0_25, %c0_26] : memref<1x128xf32, #tpu.memory_space<vmem>>, vector<1x128xf32>
    tpu.vector_store %arg14[%c0_25, %c0_26], %21 {strides = array<i32>} : memref<1x128xf32, #tpu.memory_space<vmem>>, vector<1x128xf32>,
    %c2_i32 = arith.constant 2 : i32
    %23 = arith.cmpi eq, %arg2, %c2_i32 : i32
    %24 = arith.extui %23 : i1 to i32
    %c0_i32_27 = arith.constant 0 : i32
    %25 = arith.cmpi ne, %24, %c0_i32_27 : i32
    scf.if %25 {
      %c0_28 = arith.constant 0 : index
      %c0_29 = arith.constant 0 : index
      %26 = vector.load %arg12[%c0_28, %c0_29] : memref<16x128xf32, #tpu.memory_space<vmem>>, vector<16x128xf32>
      %c0_30 = arith.constant 0 : index
      %c0_31 = arith.constant 0 : index
      %27 = vector.load %arg13[%c0_30, %c0_31] : memref<16x8xf32, #tpu.memory_space<vmem>>, vector<16x8xf32>
      %c0_32 = arith.constant 0 : index
      %c0_33 = arith.constant 0 : index
      %28 = vector.load %arg7[%c0_32, %c0_33] : memref<128x8xf32, #tpu.memory_space<vmem>>, vector<128x8xf32>
      %cst_34 = arith.constant dense<0.000000e+00> : vector<16x128xf32>
      %29 = tpu.matmul %27, %28, %cst_34 {dimension_numbers = #tpu.dot_dimension_numbers<[1], [1], [0], [0], [0, 0, 1, 0], [], []>} : vector<16x8xf32>, vector<128x8xf32>, vector<16x128xf32> -> vector<16x128xf32>
      %30 = arith.addf %26, %29 : vector<16x128xf32>
      %c0_35 = arith.constant 0 : index
      %c0_36 = arith.constant 0 : index
      %31 = vector.load %arg10[%c0_35, %c0_36] : memref<1x128xf32, #tpu.memory_space<vmem>>, vector<1x128xf32>
      %32 = vector.broadcast %31 : vector<1x128xf32> to vector<16x128xf32>
      %33 = arith.addf %30, %32 : vector<16x128xf32>
      %c0_37 = arith.constant 0 : index
      %c0_38 = arith.constant 0 : index
      %34 = vector.load %arg14[%c0_37, %c0_38] : memref<1x128xf32, #tpu.memory_space<vmem>>, vector<1x128xf32>
      %35 = vector.broadcast %34 : vector<1x128xf32> to vector<16x128xf32>
      %36 = arith.addf %33, %35 : vector<16x128xf32>
      %c0_39 = arith.constant 0 : index
      %c0_40 = arith.constant 0 : index
      %37 = vector.load %arg11[%c0_39, %c0_40] : memref<16x128xf32, #tpu.memory_space<vmem>>, vector<16x128xf32>
      tpu.vector_store %arg11[%c0_39, %c0_40], %36 {strides = array<i32>} : memref<16x128xf32, #tpu.memory_space<vmem>>, vector<16x128xf32>,
    } else {
    }
    return
  }
  func.func @transform_0(%arg0: i32, %arg1: i32, %arg2: i32) -> (i32, i32) {
    %c0_i32 = arith.constant 0 : i32
    return %arg0, %arg2 : i32, i32
  }
  func.func @transform_1(%arg0: i32, %arg1: i32, %arg2: i32) -> (i32, i32) {
    %c0_i32 = arith.constant 0 : i32
    return %arg1, %arg2 : i32, i32
  }
  func.func @transform_2(%arg0: i32, %arg1: i32, %arg2: i32) -> (i32, i32) {
    %c0_i32 = arith.constant 0 : i32
    %c0_i32_0 = arith.constant 0 : i32
    return %arg1, %c0_i32 : i32, i32
  }
  func.func @transform_3(%arg0: i32, %arg1: i32, %arg2: i32) -> (i32, i32) {
    %c0_i32 = arith.constant 0 : i32
    %c0_i32_0 = arith.constant 0 : i32
    return %c0_i32, %arg2 : i32, i32
  }
  func.func @transform_4(%arg0: i32, %arg1: i32, %arg2: i32) -> (i32, i32) {
    %c0_i32 = arith.constant 0 : i32
    %c0_i32_0 = arith.constant 0 : i32
    return %arg1, %c0_i32 : i32, i32
  }
  func.func @transform_5(%arg0: i32, %arg1: i32, %arg2: i32) -> (i32, i32) {
    %c0_i32 = arith.constant 0 : i32
    %c0_i32_0 = arith.constant 0 : i32
    return %c0_i32, %arg2 : i32, i32
  }
  func.func @transform_6(%arg0: i32, %arg1: i32, %arg2: i32) -> (i32, i32) {
    %c0_i32 = arith.constant 0 : i32
    %c0_i32_0 = arith.constant 0 : i32
    return %c0_i32, %arg2 : i32, i32
  }
  func.func @transform_7(%arg0: i32, %arg1: i32, %arg2: i32) -> (i32, i32) {
    %c0_i32 = arith.constant 0 : i32
    %c0_i32_0 = arith.constant 0 : i32
    return %c0_i32, %arg1 : i32, i32
  }
  func.func @transform_8(%arg0: i32, %arg1: i32, %arg2: i32) -> (i32, i32) {
    %c0_i32 = arith.constant 0 : i32
    return %arg0, %arg1 : i32, i32
  }
}

</mosaic_0001>

<llo_original>
// kernel: tpu_custom_call.1
$region0: #{tpu_custom_call.1}
  #allocation0 [shape = 'u32[]', space=smem, size = 0x4, offset = 0x4, fixed_abs, tag = 'smem constant byte address 0x4 - core index']
  #allocation1 [shape = 'u32[144,128]{1,0:T(1,128)}', space=vmem, size = 0x12000, scoped, tag = 'internal scratch']
  #allocation2 [shape = 'f32[16,128]{1,0:T(8,128)}', space=vmem, size = 0x2000, scoped, tag = 'scratch operand']
  #allocation3 [shape = 'f32[16,8]{1,0:T(8,128)}', space=vmem, size = 0x2000, scoped, tag = 'scratch operand']
  #allocation4 [shape = 'f32[1,128]{1,0:T(1,128)}', space=vmem, size = 0x200, scoped, tag = 'scratch operand']
  %s0 = inlined_call_operand.vmem [shape: f32[16,384], index: 0, kind: input, shape index: {}]
  %s1 = inlined_call_operand.hbm [shape: f32[256,384], index: 1, kind: input, shape index: {}]
  %s2 = inlined_call_operand.vmem [shape: f32[256,8], index: 2, kind: input, shape index: {}]
  %s3 = inlined_call_operand.vmem [shape: f32[8,384], index: 3, kind: input, shape index: {}]
  %s4 = inlined_call_operand.vmem [shape: f32[256,8], index: 4, kind: input, shape index: {}]
  %s5 = inlined_call_operand.vmem [shape: f32[8,384], index: 5, kind: input, shape index: {}]
  %s6 = inlined_call_operand.vmem [shape: f32[1,384], index: 6, kind: input, shape index: {}]
  %s7 = inlined_call_operand.vmem [shape: f32[1,256], index: 7, kind: input, shape index: {}]
  %s8 = inlined_call_operand.hbm [shape: f32[16,256], index: 8, kind: output, shape index: {}]
  %s9 = sld [smem:[#allocation0]]
  $region115: #{tpu_custom_call.1} parent=0
    _
  %s11 = ssub.s32 1, %s9
  %s12 = scalar_select 0, %s11, %s9
  $region1: #{tpu_custom_call.1} parent=0
    #allocation5 [shape = 'u8[16384]{0}', space=vmem, size = 0x4000, scoped, tag = 'input window, operand 0']
    #allocation6 [shape = 'u8[131072]{0}', space=vmem, size = 0x20000, scoped, tag = 'input window, operand 1']
    #allocation7 [shape = 's32[2]{0}', space=sflag, size = 0x8, scoped, tag = 'scoped memory for tpu_custom_call.1']
    #allocation8 [shape = 's32[2]{0}', space=sflag, size = 0x8, scoped, tag = 'scoped memory for tpu_custom_call.1']
    #allocation9 [shape = 'u8[16384]{0}', space=vmem, size = 0x4000, scoped, tag = 'output window, operand 0']
    %13 = vsyncpa [#allocation7], 0
    %s14 = scalar_lea.sflag [#allocation7], 1
    %15 = vsyncpa %s14, 0
    %16 = vsyncpa [#allocation8], 0
    %s17 = scalar_lea.sflag [#allocation8], 1
    %18 = vsyncpa %s17, 0
    loop: start=0, step=1, limit=8
    $region2: #{tpu_custom_call.1} parent=1 // loop_pre_header
      _
    $region3: #{tpu_custom_call.1} parent=1 // loop_header
      %s20 = sphi 0, %s24
      %p21 = scmp.ge.s32.totalorder %s20, 8
      %s27 = sphi 0, %s46
      %s28 = sphi 0, %s42
      %s29 = sphi 0, %s38
      %s30 = sphi 0, %s27
      %s31 = sphi 0, %s28
      %s32 = sphi 0, %s29
      %s33 = sphi 0, %s30
      %s34 = sphi 0, %s31
      %s35 = sphi 0, %s32
      %s51 = sphi 0, %s53
      %s54 = sphi 0, %s51
      %s55 = sphi 0, %s54
      %s71 = sphi 0, %s55
      %s79 = sphi 0, %s81
      %s82 = sphi 0, %s79
      %s83 = sphi 0, %s82
      %s99 = sphi 0, %s83
      %s105 = sphi 0, %s107
      %s108 = sphi 0, %s105
      %s109 = sphi 0, %s108
      %s125 = sphi 0, %s109
      %s131 = sphi 0, %s133
      %s134 = sphi 0, %s131
      %s135 = sphi 0, %s134
      %s151 = sphi 0, %s135
      %s157 = sphi 0, %s159
      %s160 = sphi 0, %s157
      %s161 = sphi 0, %s160
      %s177 = sphi 0, %s161
      %s183 = sphi 0, %s185
      %s186 = sphi 0, %s183
      %s187 = sphi 0, %s186
      %s203 = sphi 0, %s187
      %s209 = sphi 0, %s211
      %s212 = sphi 0, %s209
      %s213 = sphi 0, %s212
      %s229 = sphi 0, %s213
      %s235 = sphi 0, %s237
      %s238 = sphi 0, %s235
      %s239 = sphi 0, %s238
      %s255 = sphi 0, %s239
      %s263 = sphi 0, %s265
      %s266 = sphi 0, %s263
      %s267 = sphi 0, %s266
      %s283 = sphi 0, %s267
    $region4: #{tpu_custom_call.1} parent=1 // loop_header_branch
      %23 = sbr.rel (%p21) target = $region8
    $region5: #{tpu_custom_call.1} parent=1 // loop_body
      %s25 = ssub.s32 %s20, 1
      %s26 = ssub.s32 %s20, 2
      %s36 = sadd.s32 1, %s29
      %p37 = scmp.ge.s32.totalorder %s36, 3
      %s38 = scalar_select %p37, 0, %s36
      %s39 = sadd.s32 1, %s28
      %s40 = scalar_select %p37, %s39, %s28
      %p41 = scmp.ge.s32.totalorder %s40, 2
      %s42 = scalar_select %p41, 0, %s40
      %s43 = sadd.s32 1, %s27
      %s44 = scalar_select %p41, %s43, %s27
      %p45 = scmp.ge.s32.totalorder %s44, 1
      %s46 = scalar_select %p45, 0, %s44
      %s47 = ssub.s32 %s27, %s46
      %s48 = ssub.s32 %s29, %s38
      %s49 = sor.u32 %s47, %s48
      %p50 = scmp.eq.s32.totalorder %s49, 0
      %s52 = sadd.s32 %s51, 1
      %s53 = scalar_select %p50, %s51, %s52
      %p56 = pneg %p50
      %p57 = scmp.eq.s32.totalorder %s20, 5
      %p58 = por %p56, %p57
      %p59 = scmp.ne.s32.totalorder %s51, %s54
      %p60 = scmp.eq.s32.totalorder %s20, 0
      %p61 = por %p59, %p60
      %p62 = scmp.ne.s32.totalorder %s51, %s54
      %p63 = scmp.eq.s32.totalorder %s25, 5
      %p64 = por %p62, %p63
      %p65 = scmp.ne.s32.totalorder %s54, %s55
      %p66 = scmp.eq.s32.totalorder %s25, 0
      %p67 = por %p65, %p66
      %p68 = scmp.ne.s32.totalorder %s54, %s55
      %p69 = scmp.eq.s32.totalorder %s26, 5
      %p70 = por %p68, %p69
      %p72 = scmp.ne.s32.totalorder %s55, %s71
      %p73 = scmp.eq.s32.totalorder %s26, 0
      %p74 = por %p72, %p73
      %s75 = ssub.s32 %s28, %s42
      %s76 = ssub.s32 %s29, %s38
      %s77 = sor.u32 %s75, %s76
      %p78 = scmp.eq.s32.totalorder %s77, 0
      %s80 = sadd.s32 %s79, 1
      %s81 = scalar_select %p78, %s79, %s80
      %p84 = pneg %p78
      %p85 = scmp.eq.s32.totalorder %s20, 5
      %p86 = por %p84, %p85
      %p87 = scmp.ne.s32.totalorder %s79, %s82
      %p88 = scmp.eq.s32.totalorder %s20, 0
      %p89 = por %p87, %p88
      %p90 = scmp.ne.s32.totalorder %s79, %s82
      %p91 = scmp.eq.s32.totalorder %s25, 5
      %p92 = por %p90, %p91
      %p93 = scmp.ne.s32.totalorder %s82, %s83
      %p94 = scmp.eq.s32.totalorder %s25, 0
      %p95 = por %p93, %p94
      %p96 = scmp.ne.s32.totalorder %s82, %s83
      %p97 = scmp.eq.s32.totalorder %s26, 5
      %p98 = por %p96, %p97
      %p100 = scmp.ne.s32.totalorder %s83, %s99
      %p101 = scmp.eq.s32.totalorder %s26, 0
      %p102 = por %p100, %p101
      %s103 = ssub.s32 %s28, %s42
      %p104 = scmp.eq.s32.totalorder %s103, 0
      %s106 = sadd.s32 %s105, 1
      %s107 = scalar_select %p104, %s105, %s106
      %p110 = pneg %p104
      %p111 = scmp.eq.s32.totalorder %s20, 5
      %p112 = por %p110, %p111
      %p113 = scmp.ne.s32.totalorder %s105, %s108
      %p114 = scmp.eq.s32.totalorder %s20, 0
      %p115 = por %p113, %p114
      %p116 = scmp.ne.s32.totalorder %s105, %s108
      %p117 = scmp.eq.s32.totalorder %s25, 5
      %p118 = por %p116, %p117
      %p119 = scmp.ne.s32.totalorder %s108, %s109
      %p120 = scmp.eq.s32.totalorder %s25, 0
      %p121 = por %p119, %p120
      %p122 = scmp.ne.s32.totalorder %s108, %s109
      %p123 = scmp.eq.s32.totalorder %s26, 5
      %p124 = por %p122, %p123
      %p126 = scmp.ne.s32.totalorder %s109, %s125
      %p127 = scmp.eq.s32.totalorder %s26, 0
      %p128 = por %p126, %p127
      %s129 = ssub.s32 %s29, %s38
      %p130 = scmp.eq.s32.totalorder %s129, 0
      %s132 = sadd.s32 %s131, 1
      %s133 = scalar_select %p130, %s131, %s132
      %p136 = pneg %p130
      %p137 = scmp.eq.s32.totalorder %s20, 5
      %p138 = por %p136, %p137
      %p139 = scmp.ne.s32.totalorder %s131, %s134
      %p140 = scmp.eq.s32.totalorder %s20, 0
      %p141 = por %p139, %p140
      %p142 = scmp.ne.s32.totalorder %s131, %s134
      %p143 = scmp.eq.s32.totalorder %s25, 5
      %p144 = por %p142, %p143
      %p145 = scmp.ne.s32.totalorder %s134, %s135
      %p146 = scmp.eq.s32.totalorder %s25, 0
      %p147 = por %p145, %p146
      %p148 = scmp.ne.s32.totalorder %s134, %s135
      %p149 = scmp.eq.s32.totalorder %s26, 5
      %p150 = por %p148, %p149
      %p152 = scmp.ne.s32.totalorder %s135, %s151
      %p153 = scmp.eq.s32.totalorder %s26, 0
      %p154 = por %p152, %p153
      %s155 = ssub.s32 %s28, %s42
      %p156 = scmp.eq.s32.totalorder %s155, 0
      %s158 = sadd.s32 %s157, 1
      %s159 = scalar_select %p156, %s157, %s158
      %p162 = pneg %p156
      %p163 = scmp.eq.s32.totalorder %s20, 5
      %p164 = por %p162, %p163
      %p165 = scmp.ne.s32.totalorder %s157, %s160
      %p166 = scmp.eq.s32.totalorder %s20, 0
      %p167 = por %p165, %p166
      %p168 = scmp.ne.s32.totalorder %s157, %s160
      %p169 = scmp.eq.s32.totalorder %s25, 5
      %p170 = por %p168, %p169
      %p171 = scmp.ne.s32.totalorder %s160, %s161
      %p172 = scmp.eq.s32.totalorder %s25, 0
      %p173 = por %p171, %p172
      %p174 = scmp.ne.s32.totalorder %s160, %s161
      %p175 = scmp.eq.s32.totalorder %s26, 5
      %p176 = por %p174, %p175
      %p178 = scmp.ne.s32.totalorder %s161, %s177
      %p179 = scmp.eq.s32.totalorder %s26, 0
      %p180 = por %p178, %p179
      %s181 = ssub.s32 %s29, %s38
      %p182 = scmp.eq.s32.totalorder %s181, 0
      %s184 = sadd.s32 %s183, 1
      %s185 = scalar_select %p182, %s183, %s184
      %p188 = pneg %p182
      %p189 = scmp.eq.s32.totalorder %s20, 5
      %p190 = por %p188, %p189
      %p191 = scmp.ne.s32.totalorder %s183, %s186
      %p192 = scmp.eq.s32.totalorder %s20, 0
      %p193 = por %p191, %p192
      %p194 = scmp.ne.s32.totalorder %s183, %s186
      %p195 = scmp.eq.s32.totalorder %s25, 5
      %p196 = por %p194, %p195
      %p197 = scmp.ne.s32.totalorder %s186, %s187
      %p198 = scmp.eq.s32.totalorder %s25, 0
      %p199 = por %p197, %p198
      %p200 = scmp.ne.s32.totalorder %s186, %s187
      %p201 = scmp.eq.s32.totalorder %s26, 5
      %p202 = por %p200, %p201
      %p204 = scmp.ne.s32.totalorder %s187, %s203
      %p205 = scmp.eq.s32.totalorder %s26, 0
      %p206 = por %p204, %p205
      %s207 = ssub.s32 %s29, %s38
      %p208 = scmp.eq.s32.totalorder %s207, 0
      %s210 = sadd.s32 %s209, 1
      %s211 = scalar_select %p208, %s209, %s210
      %p214 = pneg %p208
      %p215 = scmp.eq.s32.totalorder %s20, 5
      %p216 = por %p214, %p215
      %p217 = scmp.ne.s32.totalorder %s209, %s212
      %p218 = scmp.eq.s32.totalorder %s20, 0
      %p219 = por %p217, %p218
      %p220 = scmp.ne.s32.totalorder %s209, %s212
      %p221 = scmp.eq.s32.totalorder %s25, 5
      %p222 = por %p220, %p221
      %p223 = scmp.ne.s32.totalorder %s212, %s213
      %p224 = scmp.eq.s32.totalorder %s25, 0
      %p225 = por %p223, %p224
      %p226 = scmp.ne.s32.totalorder %s212, %s213
      %p227 = scmp.eq.s32.totalorder %s26, 5
      %p228 = por %p226, %p227
      %p230 = scmp.ne.s32.totalorder %s213, %s229
      %p231 = scmp.eq.s32.totalorder %s26, 0
      %p232 = por %p230, %p231
      %s233 = ssub.s32 %s28, %s42
      %p234 = scmp.eq.s32.totalorder %s233, 0
      %s236 = sadd.s32 %s235, 1
      %s237 = scalar_select %p234, %s235, %s236
      %p240 = pneg %p234
      %p241 = scmp.eq.s32.totalorder %s20, 5
      %p242 = por %p240, %p241
      %p243 = scmp.ne.s32.totalorder %s235, %s238
      %p244 = scmp.eq.s32.totalorder %s20, 0
      %p245 = por %p243, %p244
      %p246 = scmp.ne.s32.totalorder %s235, %s238
      %p247 = scmp.eq.s32.totalorder %s25, 5
      %p248 = por %p246, %p247
      %p249 = scmp.ne.s32.totalorder %s238, %s239
      %p250 = scmp.eq.s32.totalorder %s25, 0
      %p251 = por %p249, %p250
      %p252 = scmp.ne.s32.totalorder %s238, %s239
      %p253 = scmp.eq.s32.totalorder %s26, 5
      %p254 = por %p252, %p253
      %p256 = scmp.ne.s32.totalorder %s239, %s255
      %p257 = scmp.eq.s32.totalorder %s26, 0
      %p258 = por %p256, %p257
      %s259 = ssub.s32 %s27, %s46
      %s260 = ssub.s32 %s28, %s42
      %s261 = sor.u32 %s259, %s260
      %p262 = scmp.eq.s32.totalorder %s261, 0
      %s264 = sadd.s32 %s263, 1
      %s265 = scalar_select %p262, %s263, %s264
      %p268 = pneg %p262
      %p269 = scmp.eq.s32.totalorder %s20, 5
      %p270 = por %p268, %p269
      %p271 = scmp.ne.s32.totalorder %s263, %s266
      %p272 = scmp.eq.s32.totalorder %s20, 0
      %p273 = por %p271, %p272
      %p274 = scmp.ne.s32.totalorder %s263, %s266
      %p275 = scmp.eq.s32.totalorder %s25, 5
      %p276 = por %p274, %p275
      %p277 = scmp.ne.s32.totalorder %s266, %s267
      %p278 = scmp.eq.s32.totalorder %s25, 0
      %p279 = por %p277, %p278
      %p280 = scmp.ne.s32.totalorder %s266, %s267
      %p281 = scmp.eq.s32.totalorder %s26, 5
      %p282 = por %p280, %p281
      %p284 = scmp.ne.s32.totalorder %s267, %s283
      %p285 = scmp.eq.s32.totalorder %s26, 0
      %p286 = por %p284, %p285
      %p287 = scmp.le.s32.totalorder 1, %s20
      %p288 = scmp.lt.s32.totalorder %s20, 7
      %p289 = pnand %p287, %p288
      %p290 = pneg %p289
      // Predicated region
      $region9: #{tpu_custom_call.1} parent=5 // pred_check
        _
      $region10: #{tpu_custom_call.1} parent=5 // pred_check_branch
        %292 = sbr.rel (%p289) target = $region12
      $region11: #{tpu_custom_call.1} parent=5 // pred_region
        %s293 = ssub.s32 %s20, 1
      $region12: #{tpu_custom_call.1} parent=5 // pred_fallthru
        _
      %p294 = scmp.lt.s32.totalorder %s20, 6
      // Predicated region
      $region13: #{tpu_custom_call.1} parent=5 // pred_check
        %p295 = pneg %p294
      $region14: #{tpu_custom_call.1} parent=5 // pred_check_branch
        %297 = sbr.rel (%p295) target = $region16
      $region15: #{tpu_custom_call.1} parent=5 // pred_region
        // Predicated region
        $region17: #{tpu_custom_call.1} parent=15 // pred_check
          %p298 = pneg %p61
        $region18: #{tpu_custom_call.1} parent=15 // pred_check_branch
          %300 = sbr.rel (%p298) target = $region20
        $region19: #{tpu_custom_call.1} parent=15 // pred_region
          %s301 = sand.u32 %s51, 1
          %s302 = sand.u32 %s51, 1
          %s303 = smul.addr %s302, 16
          %s304 = scalar_lea.vmem [#allocation5], %s303
          %s305 = smul.u32 2, %s27
          %s306 = smul.addr %s305, 3
          %s307 = sadd.s32 %s29, %s306
          %s308 = smul.addr %s307, 8
          %s309 = scalar_lea.vmem %s0, %s308
          // Predicated region
          $region21: #{tpu_custom_call.1} parent=19 // pred_check
            _
          $region22: #{tpu_custom_call.1} parent=19 // pred_check_branch
            %311 = sbr.rel (0) target = $region24
          $region23: #{tpu_custom_call.1} parent=19 // pred_region
            // Predicated region
            $region25: #{tpu_custom_call.1} parent=23 // pred_check
              _
            $region26: #{tpu_custom_call.1} parent=23 // pred_check_branch
              %313 = sbr.rel (0) target = $region28
            $region27: #{tpu_custom_call.1} parent=23 // pred_region
              // Predicated region
              $region40: #{tpu_custom_call.1} parent=27 // pred_check
                _
              $region41: #{tpu_custom_call.1} parent=27 // pred_check_branch
                %331 = sbr.rel (0) target = $region43
              $region42: #{tpu_custom_call.1} parent=27 // pred_region
                loop: start=0, step=1, limit=1
                $region44: #{tpu_custom_call.1} parent=42 // loop_pre_header
                  _
                $region45: #{tpu_custom_call.1} parent=42 // loop_header
                  %s333 = sphi 0, %s337
                  %p334 = scmp.ge.s32.totalorder %s333, 1
                  %s338 = sphi %s309, %s309
                  %s339 = sphi %s304, %s304
                $region46: #{tpu_custom_call.1} parent=42 // loop_header_branch
                  %336 = sbr.rel (%p334) target = $region50
                $region47: #{tpu_custom_call.1} parent=42 // loop_body
                  %v340 = vld [vmem:[%s338] sm:$0xff]
                  %341 = vst [vmem:[%s339] sm:$0xff] %v340
                  %v342 = vld [vmem:[%s338 + $0x18] sm:$0xff]
                  %343 = vst [vmem:[%s339 + $0x8] sm:$0xff] %v342
                $region48: #{tpu_custom_call.1} parent=42 // loop_footer
                  %s337 = sadd.s32 1, %s333
                $region49: #{tpu_custom_call.1} parent=42 // loop_footer_branch
                  %332 = sbr.rel target = $region45
                $region50: #{tpu_custom_call.1} parent=42 // loop_exit
                  _
              $region43: #{tpu_custom_call.1} parent=27 // pred_fallthru
                _
              // Predicated region
              $region51: #{tpu_custom_call.1} parent=27 // pred_check
                _
              $region52: #{tpu_custom_call.1} parent=27 // pred_check_branch
                %345 = sbr.rel target = $region54
              $region53: #{tpu_custom_call.1} parent=27 // pred_region
                _
              $region54: #{tpu_custom_call.1} parent=27 // pred_fallthru
                _
            $region28: #{tpu_custom_call.1} parent=23 // pred_fallthru
              _
            // Predicated region
            $region29: #{tpu_custom_call.1} parent=23 // pred_check
              _
            $region30: #{tpu_custom_call.1} parent=23 // pred_check_branch
              %315 = sbr.rel target = $region32
            $region31: #{tpu_custom_call.1} parent=23 // pred_region
              %s317 = ssub.s32 256, 1
              loop: start=0, step=1, limit=1
              $region33: #{tpu_custom_call.1} parent=31 // loop_pre_header
                _
              $region34: #{tpu_custom_call.1} parent=31 // loop_header
                %s319 = sphi 0, %s323
                %p320 = scmp.ge.s32.totalorder %s319, 1
                %s324 = sphi %s309, %s309
                %s325 = sphi %s304, %s304
              $region35: #{tpu_custom_call.1} parent=31 // loop_header_branch
                %322 = sbr.rel (%p320) target = $region39
              $region36: #{tpu_custom_call.1} parent=31 // loop_body
                %v326 = vld [vmem:[%s324] sm:%s317]
                %327 = vst [vmem:[%s325] sm:%s317] %v326
                %v328 = vld [vmem:[%s324 + $0x18] sm:%s317]
                %329 = vst [vmem:[%s325 + $0x8] sm:%s317] %v328
              $region37: #{tpu_custom_call.1} parent=31 // loop_footer
                %s323 = sadd.s32 1, %s319
              $region38: #{tpu_custom_call.1} parent=31 // loop_footer_branch
                %318 = sbr.rel target = $region34
              $region39: #{tpu_custom_call.1} parent=31 // loop_exit
                _
            $region32: #{tpu_custom_call.1} parent=23 // pred_fallthru
              _
          $region24: #{tpu_custom_call.1} parent=19 // pred_fallthru
            _
          %346 = vnop
        $region20: #{tpu_custom_call.1} parent=15 // pred_fallthru
          _
        // Predicated region
        $region55: #{tpu_custom_call.1} parent=15 // pred_check
          %p347 = pneg %p89
        $region56: #{tpu_custom_call.1} parent=15 // pred_check_branch
          %349 = sbr.rel (%p347) target = $region58
        $region57: #{tpu_custom_call.1} parent=15 // pred_region
          %s350 = sand.u32 %s79, 1
          %s351 = scalar_lea.sflag [#allocation7], %s350
          %s352 = sand.u32 %s79, 1
          %s353 = smul.addr %s352, 128
          %s354 = scalar_lea.vmem [#allocation6], %s353
          %s355 = smul.u32 16, %s28
          %s357 = ssub.s32 2048, 2048
          %358 = vsyncadd %s351, %s357
          %s359 = smul.addr %s355, 3
          %s360 = sadd.s32 %s29, %s359
          %s361 = smul.addr %s360, 128
          %s362 = scalar_lea.hbm %s1, %s361
          %s363 = sshll.u32 %s354, 4
          %s364 = int_to_ptr.vmem [resolvable:$true] %s363
          %369 = dma.hbm_to_vmem [thread:$0]  %s362, 2048, %s364, %s351, 384, 128, 8
        $region58: #{tpu_custom_call.1} parent=15 // pred_fallthru
          _
        // Predicated region
        $region59: #{tpu_custom_call.1} parent=15 // pred_check
          %p370 = pneg %p115
        $region60: #{tpu_custom_call.1} parent=15 // pred_check_branch
          %372 = sbr.rel (%p370) target = $region62
        $region61: #{tpu_custom_call.1} parent=15 // pred_region
          %s373 = smul.u32 16, %s28
          %p374 = scmp.lt.s32.totalorder %s373, 31
          %s375 = scalar_select %p374, %s373, 31
          %s376 = smul.addr %s375, 8
          %s377 = scalar_lea.vmem %s2, %s376
          %s378 = smul.u32 16, %s28
        $region62: #{tpu_custom_call.1} parent=15 // pred_fallthru
          _
        // Predicated region
        $region63: #{tpu_custom_call.1} parent=15 // pred_check
          %p379 = pneg %p141
        $region64: #{tpu_custom_call.1} parent=15 // pred_check_branch
          %381 = sbr.rel (%p379) target = $region66
        $region65: #{tpu_custom_call.1} parent=15 // pred_region
          %p382 = scmp.lt.s32.totalorder %s29, 2
          %s383 = scalar_select %p382, %s29, 2
          %s384 = smul.addr %s383, 8
          %s385 = scalar_lea.vmem %s3, %s384
        $region66: #{tpu_custom_call.1} parent=15 // pred_fallthru
          _
        // Predicated region
        $region67: #{tpu_custom_call.1} parent=15 // pred_check
          %p386 = pneg %p167
        $region68: #{tpu_custom_call.1} parent=15 // pred_check_branch
          %388 = sbr.rel (%p386) target = $region70
        $region69: #{tpu_custom_call.1} parent=15 // pred_region
          %s389 = smul.u32 16, %s28
          %p390 = scmp.lt.s32.totalorder %s389, 31
          %s391 = scalar_select %p390, %s389, 31
          %s392 = smul.addr %s391, 8
          %s393 = scalar_lea.vmem %s4, %s392
          %s394 = smul.u32 16, %s28
        $region70: #{tpu_custom_call.1} parent=15 // pred_fallthru
          _
        // Predicated region
        $region71: #{tpu_custom_call.1} parent=15 // pred_check
          %p395 = pneg %p193
        $region72: #{tpu_custom_call.1} parent=15 // pred_check_branch
          %397 = sbr.rel (%p395) target = $region74
        $region73: #{tpu_custom_call.1} parent=15 // pred_region
          %p398 = scmp.lt.s32.totalorder %s29, 2
          %s399 = scalar_select %p398, %s29, 2
          %s400 = smul.addr %s399, 8
          %s401 = scalar_lea.vmem %s5, %s400
        $region74: #{tpu_custom_call.1} parent=15 // pred_fallthru
          _
        // Predicated region
        $region75: #{tpu_custom_call.1} parent=15 // pred_check
          %p402 = pneg %p219
        $region76: #{tpu_custom_call.1} parent=15 // pred_check_branch
          %404 = sbr.rel (%p402) target = $region78
        $region77: #{tpu_custom_call.1} parent=15 // pred_region
          %p405 = scmp.lt.s32.totalorder %s29, 2
          %s406 = scalar_select %p405, %s29, 2
          %s407 = scalar_lea.vmem %s6, %s406
        $region78: #{tpu_custom_call.1} parent=15 // pred_fallthru
          _
        // Predicated region
        $region79: #{tpu_custom_call.1} parent=15 // pred_check
          %p408 = pneg %p245
        $region80: #{tpu_custom_call.1} parent=15 // pred_check_branch
          %410 = sbr.rel (%p408) target = $region82
        $region81: #{tpu_custom_call.1} parent=15 // pred_region
          %p411 = scmp.lt.s32.totalorder %s28, 1
          %s412 = scalar_select %p411, %s28, 1
          %s413 = scalar_lea.vmem %s7, %s412
        $region82: #{tpu_custom_call.1} parent=15 // pred_fallthru
          _
      $region16: #{tpu_custom_call.1} parent=5 // pred_fallthru
        _
      %p414 = scmp.le.s32.totalorder 1, %s20
      %p415 = scmp.lt.s32.totalorder %s20, 7
      %p416 = pnand %p414, %p415
      %p417 = pneg %p416
      // Predicated region
      $region83: #{tpu_custom_call.1} parent=5 // pred_check
        _
      $region84: #{tpu_custom_call.1} parent=5 // pred_check_branch
        %419 = sbr.rel (%p416) target = $region86
      $region85: #{tpu_custom_call.1} parent=5 // pred_region
        %s420 = ssub.s32 %s20, 1
        %s421 = sand.u32 %s54, 1
        %s422 = sand.u32 %s54, 1
        %s423 = smul.addr %s422, 16
        %s424 = scalar_lea.vmem [#allocation5], %s423
        // Predicated region
        $region87: #{tpu_custom_call.1} parent=85 // pred_check
          %p425 = pneg %p67
        $region88: #{tpu_custom_call.1} parent=85 // pred_check_branch
          %427 = sbr.rel (%p425) target = $region90
        $region89: #{tpu_custom_call.1} parent=85 // pred_region
          _
        $region90: #{tpu_custom_call.1} parent=85 // pred_fallthru
          _
        %s428 = sand.u32 %s82, 1
        %s429 = scalar_lea.sflag [#allocation7], %s428
        %s430 = sand.u32 %s82, 1
        %s431 = smul.addr %s430, 128
        %s432 = scalar_lea.vmem [#allocation6], %s431
        // Predicated region
        $region91: #{tpu_custom_call.1} parent=85 // pred_check
          %p433 = pneg %p95
        $region92: #{tpu_custom_call.1} parent=85 // pred_check_branch
          %435 = sbr.rel (%p433) target = $region94
        $region93: #{tpu_custom_call.1} parent=85 // pred_region
          %436 = dma.done %s429, 2048
        $region94: #{tpu_custom_call.1} parent=85 // pred_fallthru
          _
        %s437 = sand.u32 %s54, 1
        %s438 = sand.u32 %s54, 1
        %s439 = smul.addr %s438, 16
        %s440 = scalar_lea.vmem [#allocation5], %s439
        %p441 = pneg %p67
        %p442 = pneg %p64
        %s443 = sand.u32 %s82, 1
        %s444 = scalar_lea.sflag [#allocation7], %s443
        %s445 = sand.u32 %s82, 1
        %s446 = smul.addr %s445, 128
        %s447 = scalar_lea.vmem [#allocation6], %s446
        %p448 = pneg %p95
        %p449 = pneg %p92
        %s450 = smul.u32 16, %s31
        %p451 = scmp.lt.s32.totalorder %s450, 31
        %s452 = scalar_select %p451, %s450, 31
        %s453 = smul.addr %s452, 8
        %s454 = scalar_lea.vmem %s2, %s453
        %p455 = pneg %p121
        %p456 = pneg %p118
        %p457 = scmp.lt.s32.totalorder %s32, 2
        %s458 = scalar_select %p457, %s32, 2
        %s459 = smul.addr %s458, 8
        %s460 = scalar_lea.vmem %s3, %s459
        %p461 = pneg %p147
        %p462 = pneg %p144
        %s463 = smul.u32 16, %s31
        %p464 = scmp.lt.s32.totalorder %s463, 31
        %s465 = scalar_select %p464, %s463, 31
        %s466 = smul.addr %s465, 8
        %s467 = scalar_lea.vmem %s4, %s466
        %p468 = pneg %p173
        %p469 = pneg %p170
        %p470 = scmp.lt.s32.totalorder %s32, 2
        %s471 = scalar_select %p470, %s32, 2
        %s472 = smul.addr %s471, 8
        %s473 = scalar_lea.vmem %s5, %s472
        %p474 = pneg %p199
        %p475 = pneg %p196
        %p476 = scmp.lt.s32.totalorder %s32, 2
        %s477 = scalar_select %p476, %s32, 2
        %s478 = scalar_lea.vmem %s6, %s477
        %p479 = pneg %p225
        %p480 = pneg %p222
        %p481 = scmp.lt.s32.totalorder %s31, 1
        %s482 = scalar_select %p481, %s31, 1
        %s483 = scalar_lea.vmem %s7, %s482
        %p484 = pneg %p251
        %p485 = pneg %p248
        %p486 = pneg %p279
        %p487 = pneg %p276
        %s488 = sand.u32 %s266, 1
        %s489 = scalar_lea.sflag [#allocation8], %s488
        %s490 = sand.u32 %s266, 1
        %s491 = smul.addr %s490, 16
        %s492 = scalar_lea.vmem [#allocation9], %s491
        %s493 = smul.u32 2, %s30
        %s494 = smul.u32 16, %s31
        %s495 = smul.u32 16, %s31
        %p496 = scmp.lt.s32.totalorder %s495, 31
        %s497 = scalar_select %p496, %s495, 31
        %s498 = smul.addr %s497, 8
        %s499 = scalar_lea.vmem %s2, %s498
        %s500 = smul.u32 16, %s31
        %p501 = scmp.lt.s32.totalorder %s32, 2
        %s502 = scalar_select %p501, %s32, 2
        %s503 = smul.addr %s502, 8
        %s504 = scalar_lea.vmem %s3, %s503
        %s505 = smul.u32 16, %s31
        %p506 = scmp.lt.s32.totalorder %s505, 31
        %s507 = scalar_select %p506, %s505, 31
        %s508 = smul.addr %s507, 8
        %s509 = scalar_lea.vmem %s4, %s508
        %s510 = smul.u32 16, %s31
        %p511 = scmp.lt.s32.totalorder %s32, 2
        %s512 = scalar_select %p511, %s32, 2
        %s513 = smul.addr %s512, 8
        %s514 = scalar_lea.vmem %s5, %s513
        %p515 = scmp.lt.s32.totalorder %s32, 2
        %s516 = scalar_select %p515, %s32, 2
        %s517 = scalar_lea.vmem %s6, %s516
        %p518 = scmp.lt.s32.totalorder %s31, 1
        %s519 = scalar_select %p518, %s31, 1
        %s520 = scalar_lea.vmem %s7, %s519
        %s521 = smul.u32 2, %s30
        %p522 = scmp.eq.s32.totalorder %s32, 0
        // Predicated region
        $region95: #{tpu_custom_call.1} parent=85 // pred_check
          %p523 = pneg %p522
        $region96: #{tpu_custom_call.1} parent=85 // pred_check_branch
          %525 = sbr.rel (%p523) target = $region98
        $region97: #{tpu_custom_call.1} parent=85 // pred_region
          %526 = vst [vmem:[#allocation2] sm:$0xff] 0.0
          %527 = vst [vmem:[#allocation2 + $0x8] sm:$0xff] 0.0
          %vm528 = vcmask 64512
          %529 = vst.msk [vmem:[#allocation3] sm:$0xff] %vm528, 0.0
          %530 = vst.msk [vmem:[#allocation3 + $0x8] sm:$0xff] %vm528, 0.0
          %531 = vst [vmem:[#allocation4] sm:$0x1] 0.0
        $region98: #{tpu_custom_call.1} parent=85 // pred_fallthru
          _
        %v532 = vld [vmem:[%s424] sm:$0xff]
        %v533 = vld [vmem:[%s424 + $0x8] sm:$0xff]
        %v534 = vld [vmem:[%s432] sm:$0xff]
        %v535 = vld [vmem:[%s432 + $0x8] sm:$0xff]
        %v536 = vld [vmem:[%s432 + $0x10] sm:$0xff]
        %v537 = vld [vmem:[%s432 + $0x18] sm:$0xff]
        %v538 = vld [vmem:[%s432 + $0x20] sm:$0xff]
        %v539 = vld [vmem:[%s432 + $0x28] sm:$0xff]
        %v540 = vld [vmem:[%s432 + $0x30] sm:$0xff]
        %v541 = vld [vmem:[%s432 + $0x38] sm:$0xff]
        %v542 = vld [vmem:[%s432 + $0x40] sm:$0xff]
        %v543 = vld [vmem:[%s432 + $0x48] sm:$0xff]
        %v544 = vld [vmem:[%s432 + $0x50] sm:$0xff]
        %v545 = vld [vmem:[%s432 + $0x58] sm:$0xff]
        %v546 = vld [vmem:[%s432 + $0x60] sm:$0xff]
        %v547 = vld [vmem:[%s432 + $0x68] sm:$0xff]
        %v548 = vld [vmem:[%s432 + $0x70] sm:$0xff]
        %v549 = vld [vmem:[%s432 + $0x78] sm:$0xff]
        %v550 = vld [vmem:[%s499] sm:$0xff]
        %v551 = vld [vmem:[%s499 + $0x8] sm:$0xff]
        %v552 = vld [vmem:[%s499 + $0x10] sm:$0xff]
        %v553 = vld [vmem:[%s499 + $0x18] sm:$0xff]
        %v554 = vld [vmem:[%s499 + $0x20] sm:$0xff]
        %v555 = vld [vmem:[%s499 + $0x28] sm:$0xff]
        %v556 = vld [vmem:[%s499 + $0x30] sm:$0xff]
        %v557 = vld [vmem:[%s499 + $0x38] sm:$0xff]
        %v558 = vld [vmem:[%s499 + $0x40] sm:$0xff]
        %v559 = vld [vmem:[%s499 + $0x48] sm:$0xff]
        %v560 = vld [vmem:[%s499 + $0x50] sm:$0xff]
        %v561 = vld [vmem:[%s499 + $0x58] sm:$0xff]
        %v562 = vld [vmem:[%s499 + $0x60] sm:$0xff]
        %v563 = vld [vmem:[%s499 + $0x68] sm:$0xff]
        %v564 = vld [vmem:[%s499 + $0x70] sm:$0xff]
        %v565 = vld [vmem:[%s499 + $0x78] sm:$0xff]
        %v566 = vld [vmem:[%s504] sm:$0xff]
        %vm567 = vcmask 64512
        %v569 = vsel %vm567, %v550, 0
        %v572 = vsel %vm567, %v551, 0
        %v575 = vsel %vm567, %v552, 0
        %v578 = vsel %vm567, %v553, 0
        %v581 = vsel %vm567, %v554, 0
        %v584 = vsel %vm567, %v555, 0
        %v587 = vsel %vm567, %v556, 0
        %v590 = vsel %vm567, %v557, 0
        %v593 = vsel %vm567, %v558, 0
        %v596 = vsel %vm567, %v559, 0
        %v599 = vsel %vm567, %v560, 0
        %v602 = vsel %vm567, %v561, 0
        %v605 = vsel %vm567, %v562, 0
        %v608 = vsel %vm567, %v563, 0
        %v611 = vsel %vm567, %v564, 0
        %v614 = vsel %vm567, %v565, 0
        %616 = vmatprep.subr.mxu0 0.0
        %617 = vmatpush1.msra.mxu0 0.0
        %618 = vmatprep.subr.mxu0 0.0
        %619 = vmatpush1.msra.mxu0 0.0
        %620 = vmatprep.subr.mxu0 0.0
        %621 = vmatpush1.msra.mxu0 0.0
        %622 = vmatprep.subr.mxu0 0.0
        %623 = vmatpush1.msra.mxu0 0.0
        %624 = vmatprep.subr.mxu0 0.0
        %625 = vmatpush1.msra.mxu0 0.0
        %626 = vmatprep.subr.mxu0 0.0
        %627 = vmatpush1.msra.mxu0 0.0
        %628 = vmatprep.subr.mxu0 0.0
        %629 = vmatpush1.msra.mxu0 0.0
        %630 = vmatprep.subr.mxu0 0.0
        %631 = vmatpush1.msra.mxu0 0.0
        %632 = vmatprep.subr.mxu0 0.0
        %633 = vmatpush1.msra.mxu0 0.0
        %634 = vmatprep.subr.mxu0 0.0
        %635 = vmatpush1.msra.mxu0 0.0
        %636 = vmatprep.subr.mxu0 0.0
        %637 = vmatpush1.msra.mxu0 0.0
        %638 = vmatprep.subr.mxu0 0.0
        %639 = vmatpush1.msra.mxu0 0.0
        %640 = vmatprep.subr.mxu0 0.0
        %641 = vmatpush1.msra.mxu0 0.0
        %642 = vmatprep.subr.mxu0 0.0
        %643 = vmatpush1.msra.mxu0 0.0
        %644 = vmatprep.subr.mxu0 0.0
        %645 = vmatpush1.msra.mxu0 0.0
        %646 = vmatprep.subr.mxu0 0.0
        %647 = vmatpush1.msra.mxu0 %v566
        %648 = vmatprep.subr.mxu0 0.0
        %649 = vmatpush2.msra.mxu0 0.0
        %650 = vmatprep.subr.mxu0 0.0
        %651 = vmatpush2.msra.mxu0 0.0
        %652 = vmatprep.subr.mxu0 0.0
        %653 = vmatpush2.msra.mxu0 0.0
        %654 = vmatprep.subr.mxu0 0.0
        %655 = vmatpush2.msra.mxu0 0.0
        %656 = vmatprep.subr.mxu0 0.0
        %657 = vmatpush2.msra.mxu0 0.0
        %658 = vmatprep.subr.mxu0 0.0
        %659 = vmatpush2.msra.mxu0 0.0
        %660 = vmatprep.subr.mxu0 0.0
        %661 = vmatpush2.msra.mxu0 0.0
        %662 = vmatprep.subr.mxu0 0.0
        %663 = vmatpush2.msra.mxu0 0.0
        %664 = vmatprep.subr.mxu0 0.0
        %665 = vmatpush2.msra.mxu0 0.0
        %666 = vmatprep.subr.mxu0 0.0
        %667 = vmatpush2.msra.mxu0 0.0
        %668 = vmatprep.subr.mxu0 0.0
        %669 = vmatpush2.msra.mxu0 0.0
        %670 = vmatprep.subr.mxu0 0.0
        %671 = vmatpush2.msra.mxu0 0.0
        %672 = vmatprep.subr.mxu0 0.0
        %673 = vmatpush2.msra.mxu0 0.0
        %674 = vmatprep.subr.mxu0 0.0
        %675 = vmatpush2.msra.mxu0 0.0
        %676 = vmatprep.subr.mxu0 0.0
        %677 = vmatpush2.msra.mxu0 0.0
        %678 = vmatprep.subr.mxu0 0.0
        %679 = vmatpush2.msra.mxu0 0.0
        %680 = vmatprep.mubr.f32.mxu0 0.0
        %681 = vmatmul.mubr.f32.gmra.mxu0 %v569
        %v682 = vpop.f32.mrf.mxu0
        %v683 = vadd.f32 0.0, %v682
        %v684 = vpop.f32.mrf.mxu0
        %685 = vmatprep.mubr.f32.mxu0 0.0
        %686 = vmatmul.mubr.f32.gmra.mxu0 %v572
        %v687 = vpop.f32.mrf.mxu0
        %v688 = vadd.f32 0.0, %v687
        %v689 = vpop.f32.mrf.mxu0
        %690 = vmatprep.mubr.f32.mxu0 0.0
        %691 = vmatmul.mubr.f32.gmra.mxu0 %v575
        %v692 = vpop.f32.mrf.mxu0
        %v693 = vadd.f32 0.0, %v692
        %v694 = vpop.f32.mrf.mxu0
        %695 = vmatprep.mubr.f32.mxu0 0.0
        %696 = vmatmul.mubr.f32.gmra.mxu0 %v578
        %v697 = vpop.f32.mrf.mxu0
        %v698 = vadd.f32 0.0, %v697
        %v699 = vpop.f32.mrf.mxu0
        %700 = vmatprep.mubr.f32.mxu0 0.0
        %701 = vmatmul.mubr.f32.gmra.mxu0 %v581
        %v702 = vpop.f32.mrf.mxu0
        %v703 = vadd.f32 0.0, %v702
        %v704 = vpop.f32.mrf.mxu0
        %705 = vmatprep.mubr.f32.mxu0 0.0
        %706 = vmatmul.mubr.f32.gmra.mxu0 %v584
        %v707 = vpop.f32.mrf.mxu0
        %v708 = vadd.f32 0.0, %v707
        %v709 = vpop.f32.mrf.mxu0
        %710 = vmatprep.mubr.f32.mxu0 0.0
        %711 = vmatmul.mubr.f32.gmra.mxu0 %v587
        %v712 = vpop.f32.mrf.mxu0
        %v713 = vadd.f32 0.0, %v712
        %v714 = vpop.f32.mrf.mxu0
        %715 = vmatprep.mubr.f32.mxu0 0.0
        %716 = vmatmul.mubr.f32.gmra.mxu0 %v590
        %v717 = vpop.f32.mrf.mxu0
        %v718 = vadd.f32 0.0, %v717
        %v719 = vpop.f32.mrf.mxu0
        %720 = vmatprep.mubr.f32.mxu0 0.0
        %721 = vmatmul.mubr.f32.gmra.mxu0 %v593
        %v722 = vpop.f32.mrf.mxu0
        %v723 = vadd.f32 0.0, %v722
        %v724 = vpop.f32.mrf.mxu0
        %725 = vmatprep.mubr.f32.mxu0 0.0
        %726 = vmatmul.mubr.f32.gmra.mxu0 %v596
        %v727 = vpop.f32.mrf.mxu0
        %v728 = vadd.f32 0.0, %v727
        %v729 = vpop.f32.mrf.mxu0
        %730 = vmatprep.mubr.f32.mxu0 0.0
        %731 = vmatmul.mubr.f32.gmra.mxu0 %v599
        %v732 = vpop.f32.mrf.mxu0
        %v733 = vadd.f32 0.0, %v732
        %v734 = vpop.f32.mrf.mxu0
        %735 = vmatprep.mubr.f32.mxu0 0.0
        %736 = vmatmul.mubr.f32.gmra.mxu0 %v602
        %v737 = vpop.f32.mrf.mxu0
        %v738 = vadd.f32 0.0, %v737
        %v739 = vpop.f32.mrf.mxu0
        %740 = vmatprep.mubr.f32.mxu0 0.0
        %741 = vmatmul.mubr.f32.gmra.mxu0 %v605
        %v742 = vpop.f32.mrf.mxu0
        %v743 = vadd.f32 0.0, %v742
        %v744 = vpop.f32.mrf.mxu0
        %745 = vmatprep.mubr.f32.mxu0 0.0
        %746 = vmatmul.mubr.f32.gmra.mxu0 %v608
        %v747 = vpop.f32.mrf.mxu0
        %v748 = vadd.f32 0.0, %v747
        %v749 = vpop.f32.mrf.mxu0
        %750 = vmatprep.mubr.f32.mxu0 0.0
        %751 = vmatmul.mubr.f32.gmra.mxu0 %v611
        %v752 = vpop.f32.mrf.mxu0
        %v753 = vadd.f32 0.0, %v752
        %v754 = vpop.f32.mrf.mxu0
        %755 = vmatprep.mubr.f32.mxu0 0.0
        %756 = vmatmul.mubr.f32.gmra.mxu0 %v614
        %v757 = vpop.f32.mrf.mxu0
        %v758 = vadd.f32 0.0, %v757
        %v759 = vpop.f32.mrf.mxu0
        %760 = vdwg.mxu0
        %v761 = vmul.f32 %v534, %v683
        %v762 = vmul.f32 %v535, %v688
        %v763 = vmul.f32 %v536, %v693
        %v764 = vmul.f32 %v537, %v698
        %v765 = vmul.f32 %v538, %v703
        %v766 = vmul.f32 %v539, %v708
        %v767 = vmul.f32 %v540, %v713
        %v768 = vmul.f32 %v541, %v718
        %v769 = vmul.f32 %v542, %v723
        %v770 = vmul.f32 %v543, %v728
        %v771 = vmul.f32 %v544, %v733
        %v772 = vmul.f32 %v545, %v738
        %v773 = vmul.f32 %v546, %v743
        %v774 = vmul.f32 %v547, %v748
        %v775 = vmul.f32 %v548, %v753
        %v776 = vmul.f32 %v549, %v758
        %v777 = vld [vmem:[#allocation2] sm:$0xff]
        %v778 = vld [vmem:[#allocation2 + $0x8] sm:$0xff]
        %779 = vmatprep.subr.mxu0 0.0
        %780 = vmatpush1.xpose.msra.mxu0 %v776
        %781 = vmatprep.subr.mxu0 0.0
        %782 = vmatpush1.xpose.msra.mxu0 %v775
        %783 = vmatprep.subr.mxu0 0.0
        %784 = vmatpush1.xpose.msra.mxu0 %v774
        %785 = vmatprep.subr.mxu0 0.0
        %786 = vmatpush1.xpose.msra.mxu0 %v773
        %787 = vmatprep.subr.mxu0 0.0
        %788 = vmatpush1.xpose.msra.mxu0 %v772
        %789 = vmatprep.subr.mxu0 0.0
        %790 = vmatpush1.xpose.msra.mxu0 %v771
        %791 = vmatprep.subr.mxu0 0.0
        %792 = vmatpush1.xpose.msra.mxu0 %v770
        %793 = vmatprep.subr.mxu0 0.0
        %794 = vmatpush1.xpose.msra.mxu0 %v769
        %795 = vmatprep.subr.mxu0 0.0
        %796 = vmatpush1.xpose.msra.mxu0 %v768
        %797 = vmatprep.subr.mxu0 0.0
        %798 = vmatpush1.xpose.msra.mxu0 %v767
        %799 = vmatprep.subr.mxu0 0.0
        %800 = vmatpush1.xpose.msra.mxu0 %v766
        %801 = vmatprep.subr.mxu0 0.0
        %802 = vmatpush1.xpose.msra.mxu0 %v765
        %803 = vmatprep.subr.mxu0 0.0
        %804 = vmatpush1.xpose.msra.mxu0 %v764
        %805 = vmatprep.subr.mxu0 0.0
        %806 = vmatpush1.xpose.msra.mxu0 %v763
        %807 = vmatprep.subr.mxu0 0.0
        %808 = vmatpush1.xpose.msra.mxu0 %v762
        %809 = vmatprep.subr.mxu0 0.0
        %810 = vmatpush1.xpose.msra.mxu0 %v761
        %811 = vmatprep.subr.mxu0 0.0
        %812 = vmatpush2.xpose.msra.mxu0 0.0
        %813 = vmatprep.subr.mxu0 0.0
        %814 = vmatpush2.xpose.msra.mxu0 0.0
        %815 = vmatprep.subr.mxu0 0.0
        %816 = vmatpush2.xpose.msra.mxu0 0.0
        %817 = vmatprep.subr.mxu0 0.0
        %818 = vmatpush2.xpose.msra.mxu0 0.0
        %819 = vmatprep.subr.mxu0 0.0
        %820 = vmatpush2.xpose.msra.mxu0 0.0
        %821 = vmatprep.subr.mxu0 0.0
        %822 = vmatpush2.xpose.msra.mxu0 0.0
        %823 = vmatprep.subr.mxu0 0.0
        %824 = vmatpush2.xpose.msra.mxu0 0.0
        %825 = vmatprep.subr.mxu0 0.0
        %826 = vmatpush2.xpose.msra.mxu0 0.0
        %827 = vmatprep.subr.mxu0 0.0
        %828 = vmatpush2.xpose.msra.mxu0 0.0
        %829 = vmatprep.subr.mxu0 0.0
        %830 = vmatpush2.xpose.msra.mxu0 0.0
        %831 = vmatprep.subr.mxu0 0.0
        %832 = vmatpush2.xpose.msra.mxu0 0.0
        %833 = vmatprep.subr.mxu0 0.0
        %834 = vmatpush2.xpose.msra.mxu0 0.0
        %835 = vmatprep.subr.mxu0 0.0
        %836 = vmatpush2.xpose.msra.mxu0 0.0
        %837 = vmatprep.subr.mxu0 0.0
        %838 = vmatpush2.xpose.msra.mxu0 0.0
        %839 = vmatprep.subr.mxu0 0.0
        %840 = vmatpush2.xpose.msra.mxu0 0.0
        %841 = vmatprep.subr.mxu0 0.0
        %842 = vmatpush2.xpose.msra.mxu0 0.0
        %843 = vmatprep.mubr.f32.mxu0 0.0
        %844 = vmatmul.mubr.f32.gmra.mxu0 %v532
        %v845 = vpop.f32.mrf.mxu0
        %v846 = vadd.f32 0.0, %v845
        %v847 = vpop.f32.mrf.mxu0
        %848 = vmatprep.mubr.f32.mxu0 0.0
        %849 = vmatmul.mubr.f32.gmra.mxu0 %v533
        %v850 = vpop.f32.mrf.mxu0
        %v851 = vadd.f32 0.0, %v850
        %v852 = vpop.f32.mrf.mxu0
        %853 = vdwg.mxu0
        %v854 = vadd.f32 %v777, %v846
        %v855 = vadd.f32 %v778, %v851
        %856 = vst [vmem:[#allocation2] sm:$0xff] %v854
        %857 = vst [vmem:[#allocation2 + $0x8] sm:$0xff] %v855
        %v858 = vld [vmem:[#allocation3] sm:$0xff]
        %v859 = vld [vmem:[#allocation3 + $0x8] sm:$0xff]
        %v860 = vld [vmem:[%s514] sm:$0xff]
        %861 = vmatprep.subr.mxu0 0.0
        %862 = vmatpush1.xpose.msra.mxu0 0.0
        %863 = vmatprep.subr.mxu0 0.0
        %864 = vmatpush1.xpose.msra.mxu0 0.0
        %865 = vmatprep.subr.mxu0 0.0
        %866 = vmatpush1.xpose.msra.mxu0 0.0
        %867 = vmatprep.subr.mxu0 0.0
        %868 = vmatpush1.xpose.msra.mxu0 0.0
        %869 = vmatprep.subr.mxu0 0.0
        %870 = vmatpush1.xpose.msra.mxu0 0.0
        %871 = vmatprep.subr.mxu0 0.0
        %872 = vmatpush1.xpose.msra.mxu0 0.0
        %873 = vmatprep.subr.mxu0 0.0
        %874 = vmatpush1.xpose.msra.mxu0 0.0
        %875 = vmatprep.subr.mxu0 0.0
        %876 = vmatpush1.xpose.msra.mxu0 0.0
        %877 = vmatprep.subr.mxu0 0.0
        %878 = vmatpush1.xpose.msra.mxu0 0.0
        %879 = vmatprep.subr.mxu0 0.0
        %880 = vmatpush1.xpose.msra.mxu0 0.0
        %881 = vmatprep.subr.mxu0 0.0
        %882 = vmatpush1.xpose.msra.mxu0 0.0
        %883 = vmatprep.subr.mxu0 0.0
        %884 = vmatpush1.xpose.msra.mxu0 0.0
        %885 = vmatprep.subr.mxu0 0.0
        %886 = vmatpush1.xpose.msra.mxu0 0.0
        %887 = vmatprep.subr.mxu0 0.0
        %888 = vmatpush1.xpose.msra.mxu0 0.0
        %889 = vmatprep.subr.mxu0 0.0
        %890 = vmatpush1.xpose.msra.mxu0 0.0
        %891 = vmatprep.subr.mxu0 0.0
        %892 = vmatpush1.xpose.msra.mxu0 %v860
        %893 = vmatprep.subr.mxu0 0.0
        %894 = vmatpush2.xpose.msra.mxu0 0.0
        %895 = vmatprep.subr.mxu0 0.0
        %896 = vmatpush2.xpose.msra.mxu0 0.0
        %897 = vmatprep.subr.mxu0 0.0
        %898 = vmatpush2.xpose.msra.mxu0 0.0
        %899 = vmatprep.subr.mxu0 0.0
        %900 = vmatpush2.xpose.msra.mxu0 0.0
        %901 = vmatprep.subr.mxu0 0.0
        %902 = vmatpush2.xpose.msra.mxu0 0.0
        %903 = vmatprep.subr.mxu0 0.0
        %904 = vmatpush2.xpose.msra.mxu0 0.0
        %905 = vmatprep.subr.mxu0 0.0
        %906 = vmatpush2.xpose.msra.mxu0 0.0
        %907 = vmatprep.subr.mxu0 0.0
        %908 = vmatpush2.xpose.msra.mxu0 0.0
        %909 = vmatprep.subr.mxu0 0.0
        %910 = vmatpush2.xpose.msra.mxu0 0.0
        %911 = vmatprep.subr.mxu0 0.0
        %912 = vmatpush2.xpose.msra.mxu0 0.0
        %913 = vmatprep.subr.mxu0 0.0
        %914 = vmatpush2.xpose.msra.mxu0 0.0
        %915 = vmatprep.subr.mxu0 0.0
        %916 = vmatpush2.xpose.msra.mxu0 0.0
        %917 = vmatprep.subr.mxu0 0.0
        %918 = vmatpush2.xpose.msra.mxu0 0.0
        %919 = vmatprep.subr.mxu0 0.0
        %920 = vmatpush2.xpose.msra.mxu0 0.0
        %921 = vmatprep.subr.mxu0 0.0
        %922 = vmatpush2.xpose.msra.mxu0 0.0
        %923 = vmatprep.subr.mxu0 0.0
        %924 = vmatpush2.xpose.msra.mxu0 0.0
        %925 = vmatprep.mubr.f32.mxu0 0.0
        %926 = vmatmul.mubr.f32.gmra.mxu0 %v532
        %v927 = vpop.f32.mrf.mxu0
        %v928 = vadd.f32 0.0, %v927
        %v929 = vpop.f32.mrf.mxu0
        %930 = vmatprep.mubr.f32.mxu0 0.0
        %931 = vmatmul.mubr.f32.gmra.mxu0 %v533
        %v932 = vpop.f32.mrf.mxu0
        %v933 = vadd.f32 0.0, %v932
        %v934 = vpop.f32.mrf.mxu0
        %935 = vdwg.mxu0
        %v936 = vadd.f32 %v858, %v928
        %v937 = vadd.f32 %v859, %v933
        %938 = vst.msk [vmem:[#allocation3] sm:$0xff] %vm567, %v936
        %939 = vst.msk [vmem:[#allocation3 + $0x8] sm:$0xff] %vm567, %v937
        %v940 = vld [vmem:[#allocation4] sm:$0x1]
        %v941 = vld [vmem:[%s517] sm:$0x1]
        %942 = vmatprep.subr.mxu0 0.0
        %943 = vmatpush1.xpose.msra.mxu0 %v549
        %944 = vmatprep.subr.mxu0 0.0
        %945 = vmatpush1.xpose.msra.mxu0 %v548
        %946 = vmatprep.subr.mxu0 0.0
        %947 = vmatpush1.xpose.msra.mxu0 %v547
        %948 = vmatprep.subr.mxu0 0.0
        %949 = vmatpush1.xpose.msra.mxu0 %v546
        %950 = vmatprep.subr.mxu0 0.0
        %951 = vmatpush1.xpose.msra.mxu0 %v545
        %952 = vmatprep.subr.mxu0 0.0
        %953 = vmatpush1.xpose.msra.mxu0 %v544
        %954 = vmatprep.subr.mxu0 0.0
        %955 = vmatpush1.xpose.msra.mxu0 %v543
        %956 = vmatprep.subr.mxu0 0.0
        %957 = vmatpush1.xpose.msra.mxu0 %v542
        %958 = vmatprep.subr.mxu0 0.0
        %959 = vmatpush1.xpose.msra.mxu0 %v541
        %960 = vmatprep.subr.mxu0 0.0
        %961 = vmatpush1.xpose.msra.mxu0 %v540
        %962 = vmatprep.subr.mxu0 0.0
        %963 = vmatpush1.xpose.msra.mxu0 %v539
        %964 = vmatprep.subr.mxu0 0.0
        %965 = vmatpush1.xpose.msra.mxu0 %v538
        %966 = vmatprep.subr.mxu0 0.0
        %967 = vmatpush1.xpose.msra.mxu0 %v537
        %968 = vmatprep.subr.mxu0 0.0
        %969 = vmatpush1.xpose.msra.mxu0 %v536
        %970 = vmatprep.subr.mxu0 0.0
        %971 = vmatpush1.xpose.msra.mxu0 %v535
        %972 = vmatprep.subr.mxu0 0.0
        %973 = vmatpush1.xpose.msra.mxu0 %v534
        %974 = vmatprep.subr.mxu0 0.0
        %975 = vmatpush2.xpose.msra.mxu0 0.0
        %976 = vmatprep.subr.mxu0 0.0
        %977 = vmatpush2.xpose.msra.mxu0 0.0
        %978 = vmatprep.subr.mxu0 0.0
        %979 = vmatpush2.xpose.msra.mxu0 0.0
        %980 = vmatprep.subr.mxu0 0.0
        %981 = vmatpush2.xpose.msra.mxu0 0.0
        %982 = vmatprep.subr.mxu0 0.0
        %983 = vmatpush2.xpose.msra.mxu0 0.0
        %984 = vmatprep.subr.mxu0 0.0
        %985 = vmatpush2.xpose.msra.mxu0 0.0
        %986 = vmatprep.subr.mxu0 0.0
        %987 = vmatpush2.xpose.msra.mxu0 0.0
        %988 = vmatprep.subr.mxu0 0.0
        %989 = vmatpush2.xpose.msra.mxu0 0.0
        %990 = vmatprep.subr.mxu0 0.0
        %991 = vmatpush2.xpose.msra.mxu0 0.0
        %992 = vmatprep.subr.mxu0 0.0
        %993 = vmatpush2.xpose.msra.mxu0 0.0
        %994 = vmatprep.subr.mxu0 0.0
        %995 = vmatpush2.xpose.msra.mxu0 0.0
        %996 = vmatprep.subr.mxu0 0.0
        %997 = vmatpush2.xpose.msra.mxu0 0.0
        %998 = vmatprep.subr.mxu0 0.0
        %999 = vmatpush2.xpose.msra.mxu0 0.0
        %1000 = vmatprep.subr.mxu0 0.0
        %1001 = vmatpush2.xpose.msra.mxu0 0.0
        %1002 = vmatprep.subr.mxu0 0.0
        %1003 = vmatpush2.xpose.msra.mxu0 0.0
        %1004 = vmatprep.subr.mxu0 0.0
        %1005 = vmatpush2.xpose.msra.mxu0 0.0
        %1006 = vmatprep.mubr.f32.mxu0 0.0
        %1007 = vmatmul.mubr.f32.gmra.mxu0 %v941
        %v1008 = vpop.f32.mrf.mxu0
        %v1009 = vadd.f32 0.0, %v1008
        %v1010 = vpop.f32.mrf.mxu0
        %1011 = vdwg.mxu0
        %v1012 = vadd.f32 %v940, %v1009
        %1013 = vst [vmem:[#allocation4] sm:$0x1] %v1012
        %p1014 = scmp.eq.s32.totalorder %s32, 2
        // Predicated region
        $region99: #{tpu_custom_call.1} parent=85 // pred_check
          %p1015 = pneg %p1014
        $region100: #{tpu_custom_call.1} parent=85 // pred_check_branch
          %1017 = sbr.rel (%p1015) target = $region102
        $region101: #{tpu_custom_call.1} parent=85 // pred_region
          %v1018 = vld [vmem:[#allocation2] sm:$0xff]
          %v1019 = vld [vmem:[#allocation2 + $0x8] sm:$0xff]
          %v1020 = vld [vmem:[#allocation3] sm:$0xff]
          %v1021 = vld [vmem:[#allocation3 + $0x8] sm:$0xff]
          %v1022 = vld [vmem:[%s509] sm:$0xff]
          %v1023 = vld [vmem:[%s509 + $0x8] sm:$0xff]
          %v1024 = vld [vmem:[%s509 + $0x10] sm:$0xff]
          %v1025 = vld [vmem:[%s509 + $0x18] sm:$0xff]
          %v1026 = vld [vmem:[%s509 + $0x20] sm:$0xff]
          %v1027 = vld [vmem:[%s509 + $0x28] sm:$0xff]
          %v1028 = vld [vmem:[%s509 + $0x30] sm:$0xff]
          %v1029 = vld [vmem:[%s509 + $0x38] sm:$0xff]
          %v1030 = vld [vmem:[%s509 + $0x40] sm:$0xff]
          %v1031 = vld [vmem:[%s509 + $0x48] sm:$0xff]
          %v1032 = vld [vmem:[%s509 + $0x50] sm:$0xff]
          %v1033 = vld [vmem:[%s509 + $0x58] sm:$0xff]
          %v1034 = vld [vmem:[%s509 + $0x60] sm:$0xff]
          %v1035 = vld [vmem:[%s509 + $0x68] sm:$0xff]
          %v1036 = vld [vmem:[%s509 + $0x70] sm:$0xff]
          %v1037 = vld [vmem:[%s509 + $0x78] sm:$0xff]
          %v1039 = vsel %vm567, %v1020, 0
          %v1042 = vsel %vm567, %v1021, 0
          %v1045 = vsel %vm567, %v1022, 0
          %v1048 = vsel %vm567, %v1023, 0
          %v1051 = vsel %vm567, %v1024, 0
          %v1054 = vsel %vm567, %v1025, 0
          %v1057 = vsel %vm567, %v1026, 0
          %v1060 = vsel %vm567, %v1027, 0
          %v1063 = vsel %vm567, %v1028, 0
          %v1066 = vsel %vm567, %v1029, 0
          %v1069 = vsel %vm567, %v1030, 0
          %v1072 = vsel %vm567, %v1031, 0
          %v1075 = vsel %vm567, %v1032, 0
          %v1078 = vsel %vm567, %v1033, 0
          %v1081 = vsel %vm567, %v1034, 0
          %v1084 = vsel %vm567, %v1035, 0
          %v1087 = vsel %vm567, %v1036, 0
          %v1090 = vsel %vm567, %v1037, 0
          %1092 = vmatprep.subr.mxu0 0.0
          %1093 = vmatpush1.xpose.msra.mxu0 %v1090
          %1094 = vmatprep.subr.mxu0 0.0
          %1095 = vmatpush1.xpose.msra.mxu0 %v1087
          %1096 = vmatprep.subr.mxu0 0.0
          %1097 = vmatpush1.xpose.msra.mxu0 %v1084
          %1098 = vmatprep.subr.mxu0 0.0
          %1099 = vmatpush1.xpose.msra.mxu0 %v1081
          %1100 = vmatprep.subr.mxu0 0.0
          %1101 = vmatpush1.xpose.msra.mxu0 %v1078
          %1102 = vmatprep.subr.mxu0 0.0
          %1103 = vmatpush1.xpose.msra.mxu0 %v1075
          %1104 = vmatprep.subr.mxu0 0.0
          %1105 = vmatpush1.xpose.msra.mxu0 %v1072
          %1106 = vmatprep.subr.mxu0 0.0
          %1107 = vmatpush1.xpose.msra.mxu0 %v1069
          %1108 = vmatprep.subr.mxu0 0.0
          %1109 = vmatpush1.xpose.msra.mxu0 %v1066
          %1110 = vmatprep.subr.mxu0 0.0
          %1111 = vmatpush1.xpose.msra.mxu0 %v1063
          %1112 = vmatprep.subr.mxu0 0.0
          %1113 = vmatpush1.xpose.msra.mxu0 %v1060
          %1114 = vmatprep.subr.mxu0 0.0
          %1115 = vmatpush1.xpose.msra.mxu0 %v1057
          %1116 = vmatprep.subr.mxu0 0.0
          %1117 = vmatpush1.xpose.msra.mxu0 %v1054
          %1118 = vmatprep.subr.mxu0 0.0
          %1119 = vmatpush1.xpose.msra.mxu0 %v1051
          %1120 = vmatprep.subr.mxu0 0.0
          %1121 = vmatpush1.xpose.msra.mxu0 %v1048
          %1122 = vmatprep.subr.mxu0 0.0
          %1123 = vmatpush1.xpose.msra.mxu0 %v1045
          %1124 = vmatprep.subr.mxu0 0.0
          %1125 = vmatpush2.xpose.msra.mxu0 0.0
          %1126 = vmatprep.subr.mxu0 0.0
          %1127 = vmatpush2.xpose.msra.mxu0 0.0
          %1128 = vmatprep.subr.mxu0 0.0
          %1129 = vmatpush2.xpose.msra.mxu0 0.0
          %1130 = vmatprep.subr.mxu0 0.0
          %1131 = vmatpush2.xpose.msra.mxu0 0.0
          %1132 = vmatprep.subr.mxu0 0.0
          %1133 = vmatpush2.xpose.msra.mxu0 0.0
          %1134 = vmatprep.subr.mxu0 0.0
          %1135 = vmatpush2.xpose.msra.mxu0 0.0
          %1136 = vmatprep.subr.mxu0 0.0
          %1137 = vmatpush2.xpose.msra.mxu0 0.0
          %1138 = vmatprep.subr.mxu0 0.0
          %1139 = vmatpush2.xpose.msra.mxu0 0.0
          %1140 = vmatprep.subr.mxu0 0.0
          %1141 = vmatpush2.xpose.msra.mxu0 0.0
          %1142 = vmatprep.subr.mxu0 0.0
          %1143 = vmatpush2.xpose.msra.mxu0 0.0
          %1144 = vmatprep.subr.mxu0 0.0
          %1145 = vmatpush2.xpose.msra.mxu0 0.0
          %1146 = vmatprep.subr.mxu0 0.0
          %1147 = vmatpush2.xpose.msra.mxu0 0.0
          %1148 = vmatprep.subr.mxu0 0.0
          %1149 = vmatpush2.xpose.msra.mxu0 0.0
          %1150 = vmatprep.subr.mxu0 0.0
          %1151 = vmatpush2.xpose.msra.mxu0 0.0
          %1152 = vmatprep.subr.mxu0 0.0
          %1153 = vmatpush2.xpose.msra.mxu0 0.0
          %1154 = vmatprep.subr.mxu0 0.0
          %1155 = vmatpush2.xpose.msra.mxu0 0.0
          %1156 = vmatprep.mubr.f32.mxu0 0.0
          %1157 = vmatmul.mubr.f32.gmra.mxu0 %v1039
          %v1158 = vpop.f32.mrf.mxu0
          %v1159 = vadd.f32 0.0, %v1158
          %v1160 = vpop.f32.mrf.mxu0
          %1161 = vmatprep.mubr.f32.mxu0 0.0
          %1162 = vmatmul.mubr.f32.gmra.mxu0 %v1042
          %v1163 = vpop.f32.mrf.mxu0
          %v1164 = vadd.f32 0.0, %v1163
          %v1165 = vpop.f32.mrf.mxu0
          %1166 = vdwg.mxu0
          %v1167 = vadd.f32 %v1018, %v1159
          %v1168 = vadd.f32 %v1019, %v1164
          %v1169 = vld [vmem:[%s520] sm:$0x1]
          %v1171 = vlaneseq
          %v1172 = vshrl.u32 %v1171, 7
          %v1173 = vsub.s32 0, %v1172
          %v1174 = vrot.slane %v1169, %v1173
          %v1176 = vadd.f32 %v1167, %v1174
          %v1177 = vadd.f32 %v1168, %v1174
          %v1178 = vld [vmem:[#allocation4] sm:$0x1]
          %v1180 = vlaneseq
          %v1181 = vshrl.u32 %v1180, 7
          %v1182 = vsub.s32 0, %v1181
          %v1183 = vrot.slane %v1178, %v1182
          %v1185 = vadd.f32 %v1176, %v1183
          %v1186 = vadd.f32 %v1177, %v1183
          %1187 = vst [vmem:[%s492] sm:$0xff] %v1185
          %1188 = vst [vmem:[%s492 + $0x8] sm:$0xff] %v1186
        $region102: #{tpu_custom_call.1} parent=85 // pred_fallthru
          _
        %s1189 = sand.u32 %s266, 1
        %s1190 = scalar_lea.sflag [#allocation8], %s1189
        %s1191 = sand.u32 %s266, 1
        %s1192 = smul.addr %s1191, 16
        %s1193 = scalar_lea.vmem [#allocation9], %s1192
        // Predicated region
        $region103: #{tpu_custom_call.1} parent=85 // pred_check
          %p1194 = pneg %p276
        $region104: #{tpu_custom_call.1} parent=85 // pred_check_branch
          %1196 = sbr.rel (%p1194) target = $region106
        $region105: #{tpu_custom_call.1} parent=85 // pred_region
          %s1197 = smul.u32 2, %s30
          %s1199 = ssub.s32 256, 256
          %1200 = vsyncadd %s1190, %s1199
          %s1201 = smul.addr %s1197, 2
          %s1202 = sadd.s32 %s31, %s1201
          %s1203 = smul.addr %s1202, 128
          %s1204 = scalar_lea.hbm %s8, %s1203
          %s1205 = sshll.u32 %s1193, 4
          %s1206 = int_to_ptr.vmem [resolvable:$true] %s1205
          %1211 = dma.vmem_to_hbm [thread:$0]  %s1206, 256, %s1204, %s1190, 128, 256, 8
        $region106: #{tpu_custom_call.1} parent=85 // pred_fallthru
          _
      $region86: #{tpu_custom_call.1} parent=5 // pred_fallthru
        _
      %p1212 = scmp.le.s32.totalorder 2, %s20
      // Predicated region
      $region107: #{tpu_custom_call.1} parent=5 // pred_check
        %p1213 = pneg %p1212
      $region108: #{tpu_custom_call.1} parent=5 // pred_check_branch
        %1215 = sbr.rel (%p1213) target = $region110
      $region109: #{tpu_custom_call.1} parent=5 // pred_region
        %s1216 = ssub.s32 %s20, 2
        // Predicated region
        $region111: #{tpu_custom_call.1} parent=109 // pred_check
          %p1217 = pneg %p282
        $region112: #{tpu_custom_call.1} parent=109 // pred_check_branch
          %1219 = sbr.rel (%p1217) target = $region114
        $region113: #{tpu_custom_call.1} parent=109 // pred_region
          %s1220 = sand.u32 %s267, 1
          %s1221 = scalar_lea.sflag [#allocation8], %s1220
          %s1222 = sand.u32 %s267, 1
          %s1223 = smul.addr %s1222, 16
          %s1224 = scalar_lea.vmem [#allocation9], %s1223
          %1225 = dma.done %s1221, 256
        $region114: #{tpu_custom_call.1} parent=109 // pred_fallthru
          _
      $region110: #{tpu_custom_call.1} parent=5 // pred_fallthru
        _
    $region6: #{tpu_custom_call.1} parent=1 // loop_footer
      %s24 = sadd.s32 1, %s20
    $region7: #{tpu_custom_call.1} parent=1 // loop_footer_branch
      %19 = sbr.rel target = $region3
    $region8: #{tpu_custom_call.1} parent=1 // loop_exit
      _
    %1226 = vsyncpa [#allocation7], 1
    %s1227 = scalar_lea.sflag [#allocation7], 1
    %1228 = vsyncpa %s1227, 1
    %1229 = vsyncpa [#allocation8], 1
    %s1230 = scalar_lea.sflag [#allocation8], 1
    %1231 = vsyncpa %s1230, 1

</llo_original>
